<compile_context>
chip_gen: v7x
topology: tpu7x:2x2x1
jax: 0.10.0
libtpu: 0.0.40
codegen_flags: <defaults>
</compile_context>

<pallas_src>
import math
import functools

import jax
import jax.numpy as jnp
import numpy as np
from jax.experimental import pallas as pl
from jax.experimental.pallas import tpu as pltpu


def temporal_encoding_kernel(t_ref, w_ref, b_ref, out_ref, *, div):
    """out = div * cos(t * w + b) for one row tile.

    t_ref:   (TILE_N, 1) f32 timestamps (current row tile)
    w_ref:   (1, E)      f32 frequencies (grid-resident)
    b_ref:   (1, E)      f32 phases      (grid-resident)
    out_ref: (TILE_N, E) output tile
    """
    t = t_ref[...]                       # (TILE_N, 1)
    w = w_ref[...]                       # (1, E)
    b = b_ref[...]                       # (1, E)
    out_ref[...] = (div * jnp.cos(t * w + b)).astype(out_ref.dtype)


def _round_up(x, m):
    return ((x + m - 1) // m) * m


def _round_down(x, m):
    return (x // m) * m


def _pick_tile_n(N, E):
    """Row-tile size: ~4 MiB per buffer set, multiple of 8, >= 2 grid steps."""
    # Per-row VMEM cost: output row (E * 4 B) + lane-padded (tile_n, 1) f32
    # timestamp row (padded to 128 lanes -> 512 B).
    per_row_bytes = E * 4 + 512
    tile = _round_down(max(8, (4 << 20) // per_row_bytes), 8)
    tile = min(tile, 8192)
    if N <= tile:
        # Single block covering the whole array: block dims == array dims,
        # which is always a legal block shape.
        return N
    # Keep at least 2 grid steps so v7x's second TensorCore gets work.
    half = _round_up(pl.cdiv(N, 2), 8)
    return max(8, min(tile, half))


def temporal_encoding(time_seq, w, b, *, out_dtype=jnp.float32):
    """TemporalEncoding.forward: sqrt(1/E) * cos(time_seq[..., None] * w + b)."""
    B, S = time_seq.shape
    E = w.shape[0]
    N = B * S
    div = math.sqrt(1.0 / E)

    tile_n = _pick_tile_n(N, E)
    n_tiles = pl.cdiv(N, tile_n)

    t = time_seq.reshape(N, 1).astype(jnp.float32)
    w2 = w.reshape(1, E).astype(jnp.float32)
    b2 = b.reshape(1, E).astype(jnp.float32)

    cost = pl.CostEstimate(
        flops=2 * N * E,                 # mul + add per output element
        transcendentals=N * E,           # one cos per output element
        bytes_accessed=N * E * jnp.dtype(out_dtype).itemsize + N * 4 + 2 * E * 4,
    )

    out = pl.pallas_call(
        functools.partial(temporal_encoding_kernel, div=div),
        out_shape=jax.ShapeDtypeStruct((N, E), out_dtype),
        grid=(n_tiles,),
        in_specs=[
            pl.BlockSpec((tile_n, 1), lambda i: (i, 0)),   # per-tile timestamps
            pl.BlockSpec((1, E), lambda i: (0, 0)),        # resident w
            pl.BlockSpec((1, E), lambda i: (0, 0)),        # resident b
        ],
        out_specs=pl.BlockSpec((tile_n, E), lambda i: (i, 0)),
        compiler_params=pltpu.CompilerParams(
            dimension_semantics=("parallel",)),
        cost_estimate=cost,
    )(t, w2, b2)

    return out.reshape(B, S, E)


if __name__ == "__main__":
    B, S = 2, 8
    embed_size = 128   # lane-dense output (multiple of 128)

    # Parameters exactly as the module's __init__ (deterministic).
    w = jnp.asarray(1.0 / 10.0 ** np.linspace(0.0, 9.0, embed_size),
                    dtype=jnp.float32)
    b = jnp.zeros((embed_size,), jnp.float32)

    key = jax.random.PRNGKey(0)
    time_seq = jax.random.uniform(key, (B, S), jnp.float32, 0.0, 24.0)

    out = temporal_encoding(time_seq, w, b)
    jax.block_until_ready(out)

    # Pure-JAX reference (same math as the PyTorch forward).
    div = math.sqrt(1.0 / embed_size)
    ref = div * jnp.cos(time_seq[..., None] * w[None, None, :]
                        + b[None, None, :])
    assert out.shape == (B, S, embed_size)
    assert jnp.allclose(out, ref, atol=1e-5, rtol=1e-5)

    print("KERNEL_OK")
</pallas_src>

<mosaic_0001>
module attributes {stable_mosaic.version = 11 : i64} {
  func.func @temporal_encoding_kernel(%arg0: i32, %arg1: memref<16x1xf32, #tpu.memory_space<vmem>>, %arg2: memref<1x128xf32, #tpu.memory_space<vmem>>, %arg3: memref<1x128xf32, #tpu.memory_space<vmem>>, %arg4: memref<16x128xf32, #tpu.memory_space<vmem>>) attributes {dimension_semantics = [#tpu.dimension_semantics<parallel>], iteration_bounds = array<i64: 1>, scalar_prefetch = 0 : i64, scratch_operands = 0 : i64, tpu.core_type = #tpu.core_type<tc>, window_params = [{transform_indices = @transform_0, window_bounds = array<i64: 16, 1>}, {pipeline_mode = #tpu.pipeline_mode<synchronous>, transform_indices = @transform_1, window_bounds = array<i64: 1, 128>}, {pipeline_mode = #tpu.pipeline_mode<synchronous>, transform_indices = @transform_2, window_bounds = array<i64: 1, 128>}, {transform_indices = @transform_3, window_bounds = array<i64: 16, 128>}]} {
    %c0 = arith.constant 0 : index
    %c0_0 = arith.constant 0 : index
    %0 = vector.load %arg1[%c0, %c0_0] : memref<16x1xf32, #tpu.memory_space<vmem>>, vector<16x1xf32>
    %c0_1 = arith.constant 0 : index
    %c0_2 = arith.constant 0 : index
    %1 = vector.load %arg2[%c0_1, %c0_2] : memref<1x128xf32, #tpu.memory_space<vmem>>, vector<1x128xf32>
    %c0_3 = arith.constant 0 : index
    %c0_4 = arith.constant 0 : index
    %2 = vector.load %arg3[%c0_3, %c0_4] : memref<1x128xf32, #tpu.memory_space<vmem>>, vector<1x128xf32>
    %3 = vector.broadcast %0 : vector<16x1xf32> to vector<16x128xf32>
    %4 = vector.broadcast %1 : vector<1x128xf32> to vector<16x128xf32>
    %5 = arith.mulf %3, %4 : vector<16x128xf32>
    %6 = vector.broadcast %2 : vector<1x128xf32> to vector<16x128xf32>
    %7 = arith.addf %5, %6 : vector<16x128xf32>
    %8 = math.cos %7 : vector<16x128xf32>
    %cst = arith.constant 0.0883883461 : f32
    %9 = vector.broadcast %cst : f32 to vector<16x128xf32>
    %10 = arith.mulf %9, %8 : vector<16x128xf32>
    %c0_5 = arith.constant 0 : index
    %c0_6 = arith.constant 0 : index
    %11 = vector.load %arg4[%c0_5, %c0_6] : memref<16x128xf32, #tpu.memory_space<vmem>>, vector<16x128xf32>
    tpu.vector_store %arg4[%c0_5, %c0_6], %10 {strides = array<i32>} : memref<16x128xf32, #tpu.memory_space<vmem>>, vector<16x128xf32>,
    return
  }
  func.func @transform_0(%arg0: i32) -> (i32, i32) {
    %c0_i32 = arith.constant 0 : i32
    %c0_i32_0 = arith.constant 0 : i32
    return %arg0, %c0_i32 : i32, i32
  }
  func.func @transform_1(%arg0: i32) -> (i32, i32) {
    %c0_i32 = arith.constant 0 : i32
    %c0_i32_0 = arith.constant 0 : i32
    %c0_i32_1 = arith.constant 0 : i32
    return %c0_i32, %c0_i32_0 : i32, i32
  }
  func.func @transform_2(%arg0: i32) -> (i32, i32) {
    %c0_i32 = arith.constant 0 : i32
    %c0_i32_0 = arith.constant 0 : i32
    %c0_i32_1 = arith.constant 0 : i32
    return %c0_i32, %c0_i32_0 : i32, i32
  }
  func.func @transform_3(%arg0: i32) -> (i32, i32) {
    %c0_i32 = arith.constant 0 : i32
    %c0_i32_0 = arith.constant 0 : i32
    return %arg0, %c0_i32 : i32, i32
  }
}

</mosaic_0001>

<llo_original>
// kernel: tpu_custom_call.1
$region0: #{tpu_custom_call.1}
  #allocation0 [shape = 'u32[]', space=smem, size = 0x4, offset = 0x4, fixed_abs, tag = 'smem constant byte address 0x4 - core index']
  #allocation1 [shape = 'u32[144,128]{1,0:T(1,128)}', space=vmem, size = 0x12000, scoped, tag = 'internal scratch']
  %s0 = inlined_call_operand.vmem [shape: f32[16,1], index: 0, kind: input, shape index: {}]
  %s1 = inlined_call_operand.vmem [shape: f32[1,128], index: 1, kind: input, shape index: {}]
  %s2 = inlined_call_operand.vmem [shape: f32[1,128], index: 2, kind: input, shape index: {}]
  %s3 = inlined_call_operand.hbm [shape: f32[16,128], index: 3, kind: output, shape index: {}]
  %s4 = sld [smem:[#allocation0]]
  $region22: #{tpu_custom_call.1} parent=0
    _
  %s6 = ssub.s32 1, %s4
  %s7 = scalar_select 0, %s6, %s4
  $region1: #{tpu_custom_call.1} parent=0
    #allocation2 [shape = 'u8[8192]{0}', space=vmem, size = 0x2000, scoped, tag = 'output window, operand 0, single buffered']
    #allocation3 [shape = 's32[1]{0}', space=sflag, size = 0x4, scoped, tag = 'scoped memory for tpu_custom_call.1']
    %8 = vsyncpa [#allocation3], 0
    // Predicated region
    $region2: #{tpu_custom_call.1} parent=1 // pred_check
      _
    $region3: #{tpu_custom_call.1} parent=1 // pred_check_branch
      %10 = sbr.rel (0) target = $region5
    $region4: #{tpu_custom_call.1} parent=1 // pred_region
      _
    $region5: #{tpu_custom_call.1} parent=1 // pred_fallthru
      _
    // Predicated region
    $region6: #{tpu_custom_call.1} parent=1 // pred_check
      _
    $region7: #{tpu_custom_call.1} parent=1 // pred_check_branch
      %12 = sbr.rel (0) target = $region9
    $region8: #{tpu_custom_call.1} parent=1 // pred_region
      _
    $region9: #{tpu_custom_call.1} parent=1 // pred_fallthru
      _
    // Predicated region
    $region10: #{tpu_custom_call.1} parent=1 // pred_check
      _
    $region11: #{tpu_custom_call.1} parent=1 // pred_check_branch
      %14 = sbr.rel (0) target = $region13
    $region12: #{tpu_custom_call.1} parent=1 // pred_region
      _
    $region13: #{tpu_custom_call.1} parent=1 // pred_fallthru
      _
    %v15 = vld [vmem:[%s0] sm:$0xff]
    %v16 = vld [vmem:[%s0 + $0x8] sm:$0xff]
    %v17 = vld [vmem:[%s1] sm:$0x1]
    %v18 = vld [vmem:[%s2] sm:$0x1]
    %20 = vset.pattern.permute.xlu0 0
    %21 = vperm.xlu0 %20, %v15
    %v22 = vpop.permute.xlu0 %21
    %25 = vset.pattern.permute.xlu0 0
    %26 = vperm.xlu0 %25, %v16
    %v27 = vpop.permute.xlu0 %26
    %v30 = vlaneseq
    %v31 = vshrl.u32 %v30, 7
    %v32 = vsub.s32 0, %v31
    %v33 = vrot.slane %v17, %v32
    %v35 = vmul.f32 %v22, %v33
    %v36 = vmul.f32 %v27, %v33
    %v38 = vlaneseq
    %v39 = vshrl.u32 %v38, 7
    %v40 = vsub.s32 0, %v39
    %v41 = vrot.slane %v18, %v40
    %v43 = vadd.f32 %v35, %v41
    %v44 = vadd.f32 %v36, %v41
    %v45 = vand.u32 2147483647, %v43
    %vm46 = vcmp.le.f32.partialorder %v45, 0.7853982
    %vm47 = vcmp.lt.s32.totalorder %v43, 0
    %v48 = vand.u32 %v43, 2139095040
    %v49 = vshrl.u32 %v48, 23
    %v50 = vsub.s32 %v49, 127
    %v51 = vand.u32 2147483647, %v43
    %v52 = vand.u32 %v51, 8388607
    %v53 = vor.u32 %v52, 8388608
    %v54 = vsub.s32 0, %v53
    %v55 = vadd.s32 %v50, 1
    %vm56 = vcmp.gt.s32.totalorder %v55, 0
    %v57 = vsel %vm56, %v55, 0
    %v58 = vshrl.u32 %v57, 5
    %v59 = vand.u32 %v57, 31
    %v60 = vsub.s32 32, %v59
    %v61 = vshrl.u32 683565275, %v60
    %v62 = vshll.u32 683565275, %v59
    %v63 = vshrl.u32 2475754826, %v60
    %v64 = vor.u32 %v62, %v63
    %v65 = vshll.u32 2475754826, %v59
    %v66 = vshrl.u32 2131351028, %v60
    %v67 = vor.u32 %v65, %v66
    %v68 = vshll.u32 2131351028, %v59
    %v69 = vshrl.u32 2102212464, %v60
    %v70 = vor.u32 %v68, %v69
    %v71 = vshll.u32 2102212464, %v59
    %v72 = vshrl.u32 920167782, %v60
    %v73 = vor.u32 %v71, %v72
    %v74 = vshll.u32 920167782, %v59
    %v75 = vshrl.u32 1326507024, %v60
    %v76 = vor.u32 %v74, %v75
    %vm77 = vcmp.lt.s32.totalorder %v58, 1
    %vm78 = vcmp.lt.s32.totalorder %v58, 2
    %vm79 = vcmp.lt.s32.totalorder %v58, 3
    %vm80 = vcmp.lt.s32.totalorder %v58, 4
    %v81 = vsel %vm77, %v61, %v64
    %v82 = vsel %vm80, %v70, 2102212464
    %v83 = vsel %vm79, %v67, %v82
    %v84 = vsel %vm78, %v81, %v83
    %v85 = vsel %vm77, %v64, %v67
    %v86 = vsel %vm80, %v73, 920167782
    %v87 = vsel %vm79, %v70, %v86
    %v88 = vsel %vm78, %v85, %v87
    %v89 = vsel %vm77, %v67, %v70
    %v90 = vsel %vm80, %v76, 1326507024
    %v91 = vsel %vm79, %v73, %v90
    %v92 = vsel %vm78, %v89, %v91
    %v93 = vshll.u32 %v53, 8
    %v94 = vmul.u32.u64.compose %v93, %v92
    %v95 = vextract.low.u32 %v94
    %v96 = vextract.high.u32 %v94
    %v97 = vmul.u32.u64.compose %v93, %v88
    %v98 = vextract.low.u32 %v97
    %v99 = vextract.high.u32 %v97
    %v100 = vmul.u32 %v93, %v84
    %v101 = vadd.s32 %v96, %v98
    %vm102 = vc.u32 %v96, %v98
    %v103 = vadd.s32 %v99, 1
    %v104 = vsel %vm102, %v103, %v99
    %v105 = vadd.s32 %v100, %v104
    %v106 = vadd.s32 %v105, 536870912
    %v107 = vshrl.u32 %v106, 30
    %v108 = vshll.u32 %v107, 30
    %v109 = vsub.s32 %v105, %v108
    %vm110 = vcmp.lt.s32.totalorder %v109, 0
    %v111 = vsub.s32 0, %v109
    %v112 = vsel %vm110, %v111, %v109
    %v113 = vclz %v112
    %v114 = vsub.s32 %v113, 2
    %vm115 = vcmp.gt.s32.totalorder 0, %v114
    %v116 = vsel %vm115, 0, %v114
    %v117 = vsub.s32 32, %v116
    %v118 = vshll.u32 %v109, %v116
    %v119 = vshrl.u32 %v101, %v117
    %v120 = vor.u32 %v118, %v119
    %v121 = vsub.s32 4294967266, %v116
    %v122 = vadd.s32 %v121, 127
    %v123 = vshll.u32 %v122, 23
    %v124 = vor.u32 4788187, %v123
    %v125 = vand.u32 2147483647, %v124
    %v127 = vcvt.s32.f32 %v120
    %v128 = vmul.f32 %v127, %v125
    %v129 = vxor.u32 %v128, 2147483648
    %v130 = vsel %vm47, %v129, %v128
    %v131 = vsub.s32 4, %v107
    %v132 = vsel %vm47, %v131, %v107
    %v133 = vsel %vm46, %v43, %v130
    %v134 = vsel %vm46, 0, %v132
    %v135 = vcosq.f32.pop %v133
    %v136 = vsinq.f32.pop %v133
    %vm137 = vweird.f32 %v43
    %v138 = vand.u32 %v134, 3
    %vm139 = vcmp.lt.s32.totalorder %v138, 2
    %vm140 = vcmp.eq.s32.totalorder %v138, 0
    %v141 = vxor.u32 %v136, 2147483648
    %v142 = vsel %vm140, %v135, %v141
    %vm143 = vcmp.eq.s32.totalorder %v138, 2
    %v144 = vxor.u32 %v135, 2147483648
    %v145 = vsel %vm143, %v144, %v136
    %v146 = vsel %vm139, %v142, %v145
    %v147 = vsel %vm137, nan, %v146
    %v148 = vand.u32 2147483647, %v44
    %vm149 = vcmp.le.f32.partialorder %v148, 0.7853982
    %vm150 = vcmp.lt.s32.totalorder %v44, 0
    %v151 = vand.u32 %v44, 2139095040
    %v152 = vshrl.u32 %v151, 23
    %v153 = vsub.s32 %v152, 127
    %v154 = vand.u32 2147483647, %v44
    %v155 = vand.u32 %v154, 8388607
    %v156 = vor.u32 %v155, 8388608
    %v157 = vsub.s32 0, %v156
    %v158 = vadd.s32 %v153, 1
    %vm159 = vcmp.gt.s32.totalorder %v158, 0
    %v160 = vsel %vm159, %v158, 0
    %v161 = vshrl.u32 %v160, 5
    %v162 = vand.u32 %v160, 31
    %v163 = vsub.s32 32, %v162
    %v164 = vshrl.u32 683565275, %v163
    %v165 = vshll.u32 683565275, %v162
    %v166 = vshrl.u32 2475754826, %v163
    %v167 = vor.u32 %v165, %v166
    %v168 = vshll.u32 2475754826, %v162
    %v169 = vshrl.u32 2131351028, %v163
    %v170 = vor.u32 %v168, %v169
    %v171 = vshll.u32 2131351028, %v162
    %v172 = vshrl.u32 2102212464, %v163
    %v173 = vor.u32 %v171, %v172
    %v174 = vshll.u32 2102212464, %v162
    %v175 = vshrl.u32 920167782, %v163
    %v176 = vor.u32 %v174, %v175
    %v177 = vshll.u32 920167782, %v162
    %v178 = vshrl.u32 1326507024, %v163
    %v179 = vor.u32 %v177, %v178
    %vm180 = vcmp.lt.s32.totalorder %v161, 1
    %vm181 = vcmp.lt.s32.totalorder %v161, 2
    %vm182 = vcmp.lt.s32.totalorder %v161, 3
    %vm183 = vcmp.lt.s32.totalorder %v161, 4
    %v184 = vsel %vm180, %v164, %v167
    %v185 = vsel %vm183, %v173, 2102212464
    %v186 = vsel %vm182, %v170, %v185
    %v187 = vsel %vm181, %v184, %v186
    %v188 = vsel %vm180, %v167, %v170
    %v189 = vsel %vm183, %v176, 920167782
    %v190 = vsel %vm182, %v173, %v189
    %v191 = vsel %vm181, %v188, %v190
    %v192 = vsel %vm180, %v170, %v173
    %v193 = vsel %vm183, %v179, 1326507024
    %v194 = vsel %vm182, %v176, %v193
    %v195 = vsel %vm181, %v192, %v194
    %v196 = vshll.u32 %v156, 8
    %v197 = vmul.u32.u64.compose %v196, %v195
    %v198 = vextract.low.u32 %v197
    %v199 = vextract.high.u32 %v197
    %v200 = vmul.u32.u64.compose %v196, %v191
    %v201 = vextract.low.u32 %v200
    %v202 = vextract.high.u32 %v200
    %v203 = vmul.u32 %v196, %v187
    %v204 = vadd.s32 %v199, %v201
    %vm205 = vc.u32 %v199, %v201
    %v206 = vadd.s32 %v202, 1
    %v207 = vsel %vm205, %v206, %v202
    %v208 = vadd.s32 %v203, %v207
    %v209 = vadd.s32 %v208, 536870912
    %v210 = vshrl.u32 %v209, 30
    %v211 = vshll.u32 %v210, 30
    %v212 = vsub.s32 %v208, %v211
    %vm213 = vcmp.lt.s32.totalorder %v212, 0
    %v214 = vsub.s32 0, %v212
    %v215 = vsel %vm213, %v214, %v212
    %v216 = vclz %v215
    %v217 = vsub.s32 %v216, 2
    %vm218 = vcmp.gt.s32.totalorder 0, %v217
    %v219 = vsel %vm218, 0, %v217
    %v220 = vsub.s32 32, %v219
    %v221 = vshll.u32 %v212, %v219
    %v222 = vshrl.u32 %v204, %v220
    %v223 = vor.u32 %v221, %v222
    %v224 = vsub.s32 4294967266, %v219
    %v225 = vadd.s32 %v224, 127
    %v226 = vshll.u32 %v225, 23
    %v227 = vor.u32 4788187, %v226
    %v228 = vand.u32 2147483647, %v227
    %v230 = vcvt.s32.f32 %v223
    %v231 = vmul.f32 %v230, %v228
    %v232 = vxor.u32 %v231, 2147483648
    %v233 = vsel %vm150, %v232, %v231
    %v234 = vsub.s32 4, %v210
    %v235 = vsel %vm150, %v234, %v210
    %v236 = vsel %vm149, %v44, %v233
    %v237 = vsel %vm149, 0, %v235
    %v238 = vcosq.f32.pop %v236
    %v239 = vsinq.f32.pop %v236
    %vm240 = vweird.f32 %v44
    %v241 = vand.u32 %v237, 3
    %vm242 = vcmp.lt.s32.totalorder %v241, 2
    %vm243 = vcmp.eq.s32.totalorder %v241, 0
    %v244 = vxor.u32 %v239, 2147483648
    %v245 = vsel %vm243, %v238, %v244
    %vm246 = vcmp.eq.s32.totalorder %v241, 2
    %v247 = vxor.u32 %v238, 2147483648
    %v248 = vsel %vm246, %v247, %v239
    %v249 = vsel %vm242, %v245, %v248
    %v250 = vsel %vm240, nan, %v249
    %v251 = vmul.f32 %v147, 0.088388346
    %v252 = vmul.f32 %v250, 0.088388346
    %253 = vst [vmem:[#allocation2] sm:$0xff] %v251
    %254 = vst [vmem:[#allocation2 + $0x8] sm:$0xff] %v252
    // Predicated region
    $region14: #{tpu_custom_call.1} parent=1 // pred_check
      _
    $region15: #{tpu_custom_call.1} parent=1 // pred_check_branch
      %256 = sbr.rel (0) target = $region17
    $region16: #{tpu_custom_call.1} parent=1 // pred_region
      %s258 = ssub.s32 256, 256
      %259 = vsyncadd [#allocation3], %s258
      %s260 = sshll.u32 [#allocation2], 4
      %s261 = int_to_ptr.vmem [resolvable:$true] %s260
      %266 = dma.vmem_to_hbm [thread:$0]  %s261, 256, %s3, [#allocation3], 128, 128, 8
    $region17: #{tpu_custom_call.1} parent=1 // pred_fallthru
      _
    // Predicated region
    $region18: #{tpu_custom_call.1} parent=1 // pred_check
      _
    $region19: #{tpu_custom_call.1} parent=1 // pred_check_branch
      %268 = sbr.rel (0) target = $region21
    $region20: #{tpu_custom_call.1} parent=1 // pred_region
      %269 = dma.done [#allocation3], 256
    $region21: #{tpu_custom_call.1} parent=1 // pred_fallthru
      _
    %270 = vsyncpa [#allocation3], 1

</llo_original>
